<compile_context>
chip_gen: v7x
topology: tpu7x:2x2x1
jax: 0.10.0
libtpu: 0.0.40
codegen_flags: <defaults>
</compile_context>

<pallas_src>
import functools

import jax
import jax.numpy as jnp
import numpy as np
from jax.experimental import pallas as pl
from jax.experimental.pallas import tpu as pltpu

LATENT = 256
FLAT = 512 * 3 * 6
ENC_CH = [3, 16, 32, 64, 128, 256, 512]
DEC_CH = [512, 256, 128, 64, 32, 16, 3]
# Lane-densification plan: fold `group` consecutive output pixels into one GEMM
# row (block-diag weight) and/or zero-pad OC so the GEMM output is >=128 lanes.
ENC_GROUP = [8, 4, 2, 1, 1, 1]          # enc0..enc5 -> N = 128 for the small-OC layers
DEC_GROUP = [1, 1, 1, 1, 2, 8]          # dec0..dec5
DEC_OCPAD = [256, 128, 64, 32, 16, 4]   # dec5: OC 3 -> 4 (sliced away after shuffle)


def _tpu_budgets():
    """Generation-aware budgets: v5e/v6e have 128 MiB VMEM/core, v7x has 64 MiB."""
    vmem = None
    try:
        info = pltpu.get_tpu_info()
        for name in ("vmem_capacity_bytes", "vmem_bytes", "vmem_size_bytes"):
            v = getattr(info, name, None)
            if v:
                vmem = int(v)
                break
    except Exception:
        vmem = None
    if vmem is None:
        vmem = 64 * 1024 * 1024                      # conservative (v7x-sized)
    if vmem >= 100 * 1024 * 1024:                    # v5e / v6e (128 MiB)
        return 80 * 2**20, 8 * 2**20, 18 * 2**20
    return 32 * 2**20, int(2.5 * 2**20), 6 * 2**20   # v7x (64 MiB)


VMEM_LIMIT, W_BLOCK_BYTES, TILE_BUDGET = _tpu_budgets()


# ---------------------------------------------------------------------------
# Pallas kernels
# ---------------------------------------------------------------------------
def _gemm_kernel(*refs, act, with_stats):
    """y = act(x @ w + b); optionally emits per-column sum / sum-of-squares
    (BatchNorm batch statistics) for this M-block as extra outputs."""
    x_ref, w_ref, b_ref, o_ref = refs[0], refs[1], refs[2], refs[3]
    y = jnp.dot(x_ref[...], w_ref[...], preferred_element_type=jnp.float32)
    y = y + b_ref[...]
    if act == "leaky_relu":
        y = jnp.where(y >= 0.0, y, 0.2 * y)
    elif act == "sigmoid":
        y = jax.nn.sigmoid(y)
    o_ref[...] = y.astype(o_ref.dtype)
    if with_stats:
        s_ref, q_ref = refs[4], refs[5]
        s_ref[...] = jnp.sum(y, axis=0, keepdims=True)[None]
        q_ref[...] = jnp.sum(y * y, axis=0, keepdims=True)[None]


def _fc_reparam_kernel(x_ref, w_ref, b_ref, eps_ref, ml_ref, z_ref, *, nk, latent):
    """K-tiled GEMM for [fc_mu | fc_logvar]; accumulates directly into the resident
    ml output block; epilogue computes z = mu + eps * exp(0.5*logvar)."""
    k = pl.program_id(0)

    @pl.when(k == 0)
    def _():
        ml_ref[...] = jnp.zeros_like(ml_ref)

    ml_ref[...] += jnp.dot(x_ref[...], w_ref[...],
                           preferred_element_type=jnp.float32)

    @pl.when(k == nk - 1)
    def _():
        y = ml_ref[...] + b_ref[...]
        ml_ref[...] = y
        mu = y[:, :latent]
        logvar = y[:, latent:]
        z_ref[...] = mu + eps_ref[...] * jnp.exp(0.5 * logvar)


# ---------------------------------------------------------------------------
# Tile selection (VMEM-budget aware; keeps blocks (8,128)/(16,128)-legal)
# ---------------------------------------------------------------------------
def _pick_tn(K, N):
    if N % 128 != 0 or K * N * 2 <= W_BLOCK_BYTES:
        return N
    best = 128
    for d in range(128, N + 1, 128):
        if N % d == 0 and K * d * 2 <= W_BLOCK_BYTES:
            best = d
    return best


def _pick_tm(M, K, tn):
    def fp(tm):  # double-buffered working set: bf16 x/w, f32 out + stats
        return 2 * (tm * K * 2 + K * tn * 2 + tm * tn * 4 + 3 * tn * 4)

    if fp(M) <= TILE_BUDGET:
        return M
    best = None
    t = 8
    while t < M:
        if M % t == 0 and fp(t) <= TILE_BUDGET:
            best = t
        t += 8
    return best if best is not None else (8 if M % 8 == 0 else M)


# ---------------------------------------------------------------------------
# Pallas wrappers
# ---------------------------------------------------------------------------
def gemm(x, w, b, *, act="none", with_stats=False, out_dtype=jnp.float32):
    """(M,K)@(K,N)+b with fused activation (and optional fused BN statistics).
    x/w streamed as bf16; accumulate + epilogue in f32; output cast to out_dtype."""
    M, K = x.shape
    K2, N = w.shape
    assert K2 == K
    tn = _pick_tn(K, N)
    tm = _pick_tm(M, K, tn)
    # Prefer >=2 grid blocks so the second TensorCore (v7x megacore) is never idle.
    if (M // tm) * (N // tn) == 1:
        if tn % 256 == 0:
            tn //= 2
        elif tm % 16 == 0:
            tm //= 2
    nm, nn = M // tm, N // tn
    if out_dtype == jnp.bfloat16 and (tm % 16 != 0 or tn % 128 != 0):
        out_dtype = jnp.float32  # keep bf16 output tiles natively (16,128)-legal

    kernel = functools.partial(_gemm_kernel, act=act, with_stats=with_stats)
    in_specs = [
        pl.BlockSpec((tm, K), lambda i, j: (i, 0)),
        pl.BlockSpec((K, tn), lambda i, j: (0, j)),
        pl.BlockSpec((1, tn), lambda i, j: (0, j)),
    ]
    y_shape = jax.ShapeDtypeStruct((M, N), out_dtype)
    y_spec = pl.BlockSpec((tm, tn), lambda i, j: (i, j))
    if with_stats:
        stat_shape = jax.ShapeDtypeStruct((nm, 1, N), jnp.float32)
        stat_spec = pl.BlockSpec((1, 1, tn), lambda i, j: (i, 0, j))
        out_shape = (y_shape, stat_shape, stat_shape)
        out_specs = (y_spec, stat_spec, stat_spec)
    else:
        out_shape = y_shape
        out_specs = y_spec

    res = pl.pallas_call(
        kernel,
        out_shape=out_shape,
        grid=(nm, nn),
        in_specs=in_specs,
        out_specs=out_specs,
        compiler_params=pltpu.CompilerParams(
            dimension_semantics=("parallel", "parallel"),
            vmem_limit_bytes=VMEM_LIMIT,
        ),
    )(
        x.astype(jnp.bfloat16),
        w.astype(jnp.bfloat16),
        b.reshape(1, N).astype(jnp.float32),
    )
    if with_stats:
        y, s, q = res
        return y, jnp.sum(s, axis=(0, 1)), jnp.sum(q, axis=(0, 1))
    return res


def fc_mu_logvar_reparam(x, w, b, eps, latent):
    """Merged fc_mu|fc_logvar GEMM (K tiled, accumulating into the resident ml
    block) with the reparameterization fused into the last K-step's epilogue."""
    M, K = x.shape
    _, N = w.shape
    tk = K
    for cand in (4608, 2304, 1152):
        if K % cand == 0 and 2 * cand * N * 2 <= 2 * TILE_BUDGET:
            tk = cand
            break
    nk = K // tk
    kernel = functools.partial(_fc_reparam_kernel, nk=nk, latent=latent)
    return pl.pallas_call(
        kernel,
        out_shape=(
            jax.ShapeDtypeStruct((M, N), jnp.float32),
            jax.ShapeDtypeStruct((M, latent), jnp.float32),
        ),
        grid=(nk,),
        in_specs=[
            pl.BlockSpec((M, tk), lambda k: (0, k)),
            pl.BlockSpec((tk, N), lambda k: (k, 0)),
            pl.BlockSpec((1, N), lambda k: (0, 0)),
            pl.BlockSpec((M, latent), lambda k: (0, 0)),
        ],
        out_specs=(
            pl.BlockSpec((M, N), lambda k: (0, 0)),
            pl.BlockSpec((M, latent), lambda k: (0, 0)),
        ),
        compiler_params=pltpu.CompilerParams(
            dimension_semantics=("arbitrary",),
            vmem_limit_bytes=VMEM_LIMIT,
        ),
    )(
        x.astype(jnp.bfloat16),
        w.astype(jnp.bfloat16),
        b.reshape(1, N).astype(jnp.float32),
        eps.astype(jnp.float32),
    )


# ---------------------------------------------------------------------------
# Glue: layout plumbing (XLA).  No heavy compute here.
# ---------------------------------------------------------------------------
def _im2col(x_nhwc, kh, kw, stride, pad):
    x = jnp.pad(x_nhwc.astype(jnp.bfloat16),
                ((0, 0), (pad, pad), (pad, pad), (0, 0)))
    N, H, W, C = x.shape
    OH = (H - kh) // stride + 1
    OW = (W - kw) // stride + 1
    cols = []
    for i in range(kh):
        for j in range(kw):
            cols.append(
                x[:, i: i + stride * (OH - 1) + 1: stride,
                     j: j + stride * (OW - 1) + 1: stride, :]
            )
    patches = jnp.concatenate(cols, axis=-1)  # (N, OH, OW, kh*kw*C)
    return patches.reshape(N * OH * OW, kh * kw * C), (N, OH, OW)


def _block_diag(w, g):
    """(K,N) -> block-diagonal (g*K, g*N): folds g output pixels per GEMM row."""
    K, N = w.shape
    out = jnp.zeros((g, K, g, N), dtype=w.dtype)
    for t in range(g):
        out = out.at[t, :, t, :].set(w)
    return out.reshape(g * K, g * N)


# selector[(r, dy)] -> ky of the 4x4 ConvTranspose kernel feeding output parity r
_SUBPIX_SEL = np.zeros((2, 3, 4), np.float32)
for (_r, _d), _k in {(0, 0): 3, (0, 1): 1, (1, 1): 2, (1, 2): 0}.items():
    _SUBPIX_SEL[_r, _d, _k] = 1.0


def _conv_transpose_weight(w_iohw):
    """(IC,OC,4,4) ConvT(k4,s2,p1) -> equivalent stride-1 3x3 weight (9*IC, 4*OC)
    on the 1-padded undilated input; columns ordered (r, c, oc)."""
    IC, OC = w_iohw.shape[0], w_iohw.shape[1]
    sel = jnp.asarray(_SUBPIX_SEL, dtype=w_iohw.dtype)
    weff = jnp.einsum("rak,cbl,iokl->abirco", sel, sel, w_iohw)  # (3,3,IC,2,2,OC)
    return weff.reshape(9 * IC, 4 * OC)


def bn_affine(s, q, count, gamma, beta, eps=1e-5):
    # training-mode BN (biased batch variance), matching nn.BatchNorm2d defaults
    mean = s / count
    var = jnp.maximum(q / count - mean * mean, 0.0)
    scale = gamma / jnp.sqrt(var + eps)
    shift = beta - mean * scale
    return scale, shift


def conv2d_block(h_nhwc, wm, brow, *, group, oc, scale=None, shift=None):
    """3x3 s2 p1 conv + LeakyReLU(0.2); previous layer's BN affine folded into
    the patch construction; BN batch stats fused into the GEMM epilogue."""
    if scale is not None:
        h_nhwc = h_nhwc * scale + shift  # XLA fuses into the pad/slice/concat
    patches, (N, OH, OW) = _im2col(h_nhwc, 3, 3, stride=2, pad=1)
    M = N * OH * OW
    if group > 1:
        patches = patches.reshape(M // group, group * patches.shape[1])
    y, s, q = gemm(patches, wm, brow, act="leaky_relu", with_stats=True,
                   out_dtype=jnp.bfloat16)
    if group > 1:
        s = s.reshape(group, oc).sum(axis=0)
        q = q.reshape(group, oc).sum(axis=0)
    return y.reshape(N, OH, OW, oc), s, q


def conv_transpose_block(h_nhwc, wm, brow, *, group, ocpad, oc,
                         act="leaky_relu", with_stats=True,
                         out_dtype=jnp.bfloat16, scale=None, shift=None):
    """4x4 s2 p1 ConvTranspose via sub-pixel decomposition (no zero dilation):
    one stride-1 3x3 GEMM producing all 4 output phases (lane-dense columns via
    OC padding and/or pixel folding), then a pure-layout pixel shuffle."""
    if scale is not None:
        h_nhwc = h_nhwc * scale + shift
    N, H, W, _ = h_nhwc.shape
    patches, _ = _im2col(h_nhwc, 3, 3, stride=1, pad=1)   # (N*H*W, 9*IC)
    M = N * H * W
    if group > 1:
        patches = patches.reshape(M // group, group * patches.shape[1])
    if with_stats:
        y, s, q = gemm(patches, wm, brow, act=act, with_stats=True,
                       out_dtype=out_dtype)
        s = s.reshape(group * 4, ocpad)[:, :oc].sum(axis=0)
        q = q.reshape(group * 4, ocpad)[:, :oc].sum(axis=0)
    else:
        y = gemm(patches, wm, brow, act=act, with_stats=False, out_dtype=out_dtype)
        s = q = None
    y = (y.reshape(N, H, W, 2, 2, ocpad)
          .transpose(0, 1, 3, 2, 4, 5)
          .reshape(N, 2 * H, 2 * W, ocpad))
    if ocpad > oc:
        y = y[..., :oc]
    return y, s, q


# ---------------------------------------------------------------------------
# Parameters: synthetic torch-layout init + one-time preprocessing (hoisted out
# of the per-step forward: transposes, block-diag, sub-pixel transform, concat,
# bf16 casts all happen exactly once here).
# ---------------------------------------------------------------------------
def init_params(key):
    params = {}
    for l in range(6):
        ic, oc = ENC_CH[l], ENC_CH[l + 1]
        key, k1, k2 = jax.random.split(key, 3)
        params[f"enc{l}_w"] = jax.random.normal(k1, (oc, ic, 3, 3), jnp.float32) / np.sqrt(ic * 9)
        params[f"enc{l}_b"] = 0.01 * jax.random.normal(k2, (oc,), jnp.float32)
        params[f"enc{l}_g"] = jnp.ones((oc,), jnp.float32)
        params[f"enc{l}_beta"] = jnp.zeros((oc,), jnp.float32)
    key, k1, k2, k3, k4, k5, k6 = jax.random.split(key, 7)
    params["fc_mu_w"] = jax.random.normal(k1, (FLAT, LATENT), jnp.float32) / np.sqrt(FLAT)
    params["fc_mu_b"] = 0.01 * jax.random.normal(k2, (LATENT,), jnp.float32)
    params["fc_logvar_w"] = jax.random.normal(k3, (FLAT, LATENT), jnp.float32) / np.sqrt(FLAT)
    params["fc_logvar_b"] = 0.01 * jax.random.normal(k4, (LATENT,), jnp.float32)
    params["dec_in_w"] = jax.random.normal(k5, (LATENT, FLAT), jnp.float32) / np.sqrt(LATENT)
    params["dec_in_b"] = 0.01 * jax.random.normal(k6, (FLAT,), jnp.float32)
    for l in range(6):
        ic, oc = DEC_CH[l], DEC_CH[l + 1]
        key, k1, k2 = jax.random.split(key, 3)
        params[f"dec{l}_w"] = jax.random.normal(k1, (ic, oc, 4, 4), jnp.float32) / np.sqrt(ic * 16)
        params[f"dec{l}_b"] = 0.01 * jax.random.normal(k2, (oc,), jnp.float32)
        if l < 5:
            params[f"dec{l}_g"] = jnp.ones((oc,), jnp.float32)
            params[f"dec{l}_beta"] = jnp.zeros((oc,), jnp.float32)
    return params


def prepare_params(params):
    prep = {}
    for l in range(6):
        ic, oc = ENC_CH[l], ENC_CH[l + 1]
        g = ENC_GROUP[l]
        wm = jnp.transpose(params[f"enc{l}_w"], (2, 3, 1, 0)).reshape(9 * ic, oc)
        b = params[f"enc{l}_b"]
        if g > 1:
            wm = _block_diag(wm, g)
            b = jnp.tile(b, g)
        prep[f"enc{l}_wm"] = wm.astype(jnp.bfloat16)
        prep[f"enc{l}_b"] = b.reshape(1, -1).astype(jnp.float32)
        prep[f"enc{l}_gamma"] = params[f"enc{l}_g"]
        prep[f"enc{l}_beta"] = params[f"enc{l}_beta"]
    prep["fc_w"] = jnp.concatenate(
        [params["fc_mu_w"], params["fc_logvar_w"]], axis=1).astype(jnp.bfloat16)
    prep["fc_b"] = jnp.concatenate(
        [params["fc_mu_b"], params["fc_logvar_b"]]).reshape(1, -1).astype(jnp.float32)
    prep["dec_in_w"] = params["dec_in_w"].astype(jnp.bfloat16)
    prep["dec_in_b"] = params["dec_in_b"].reshape(1, -1).astype(jnp.float32)
    for l in range(6):
        ic, oc = DEC_CH[l], DEC_CH[l + 1]
        g, ocpad = DEC_GROUP[l], DEC_OCPAD[l]
        w = params[f"dec{l}_w"]
        b = params[f"dec{l}_b"]
        if ocpad > oc:
            w = jnp.pad(w, ((0, 0), (0, ocpad - oc), (0, 0), (0, 0)))
            b = jnp.pad(b, (0, ocpad - oc))
        wm = _conv_transpose_weight(w)          # (9*ic, 4*ocpad)
        bvec = jnp.tile(b, 4)
        if g > 1:
            wm = _block_diag(wm, g)
            bvec = jnp.tile(bvec, g)
        prep[f"dec{l}_wm"] = wm.astype(jnp.bfloat16)
        prep[f"dec{l}_b"] = bvec.reshape(1, -1).astype(jnp.float32)
        if l < 5:
            prep[f"dec{l}_gamma"] = params[f"dec{l}_g"]
            prep[f"dec{l}_beta"] = params[f"dec{l}_beta"]
    return prep


# ---------------------------------------------------------------------------
# Forward pass
# ---------------------------------------------------------------------------
def vae_forward(prep, x_nchw, eps_key):
    Nb = x_nchw.shape[0]
    h = jnp.transpose(x_nchw, (0, 2, 3, 1)).astype(jnp.float32)  # NCHW -> NHWC

    # encoder: 6 x [conv s2 p1 -> LeakyReLU(0.2) -> BatchNorm (batch stats)]
    scale = shift = None
    for l in range(6):
        h, s, q = conv2d_block(h, prep[f"enc{l}_wm"], prep[f"enc{l}_b"],
                               group=ENC_GROUP[l], oc=ENC_CH[l + 1],
                               scale=scale, shift=shift)
        count = jnp.float32(h.shape[0] * h.shape[1] * h.shape[2])
        scale, shift = bn_affine(s, q, count,
                                 prep[f"enc{l}_gamma"], prep[f"enc{l}_beta"])

    # apply last encoder BN, flatten with torch (N, C, H, W) ordering
    h = h.astype(jnp.float32) * scale + shift
    hf = jnp.transpose(h, (0, 3, 1, 2)).reshape(Nb, FLAT)

    # fc_mu | fc_logvar merged into one GEMM; reparameterize fused in epilogue
    eps = jax.random.normal(eps_key, (Nb, LATENT), jnp.float32)
    ml, z = fc_mu_logvar_reparam(hf, prep["fc_w"], prep["fc_b"], eps, LATENT)
    mu, logvar = ml[:, :LATENT], ml[:, LATENT:]

    # decoder input FC (no activation), reshape to NHWC (N, 3, 6, 512)
    hd = gemm(z, prep["dec_in_w"], prep["dec_in_b"], act="none",
              with_stats=False, out_dtype=jnp.float32)
    h = hd.reshape(Nb, 512, 3, 6).transpose(0, 2, 3, 1)

    # decoder: 5 x [convT s2 p1 k4 -> LeakyReLU(0.2) -> BN], then convT -> Sigmoid
    scale = shift = None
    for l in range(6):
        last = l == 5
        h, s, q = conv_transpose_block(
            h, prep[f"dec{l}_wm"], prep[f"dec{l}_b"],
            group=DEC_GROUP[l], ocpad=DEC_OCPAD[l], oc=DEC_CH[l + 1],
            act="sigmoid" if last else "leaky_relu",
            with_stats=not last,
            out_dtype=jnp.float32 if last else jnp.bfloat16,
            scale=scale, shift=shift)
        if not last:
            count = jnp.float32(h.shape[0] * h.shape[1] * h.shape[2])
            scale, shift = bn_affine(s, q, count,
                                     prep[f"dec{l}_gamma"], prep[f"dec{l}_beta"])

    recon = jnp.transpose(h, (0, 3, 1, 2)).astype(jnp.float32)  # NHWC -> NCHW
    return recon, mu, logvar


# ---------------------------------------------------------------------------
# Numerical self-checks (address review correctness concerns)
# ---------------------------------------------------------------------------
def _ref_conv_transpose_nhwc(x, w_iohw, b):
    """PyTorch ConvTranspose2d(k=4, s=2, p=1) reference via conv_general_dilated."""
    w_hwio = jnp.flip(jnp.transpose(w_iohw, (2, 3, 0, 1)), axis=(0, 1))
    y = jax.lax.conv_general_dilated(
        x, w_hwio, window_strides=(1, 1), padding=((2, 2), (2, 2)),
        lhs_dilation=(2, 2), dimension_numbers=("NHWC", "HWIO", "NHWC"))
    return y + b


def _ref_conv_nhwc(x, w_oihw, b):
    """PyTorch Conv2d(k=3, s=2, p=1) reference."""
    w_hwio = jnp.transpose(w_oihw, (2, 3, 1, 0))
    y = jax.lax.conv_general_dilated(
        x, w_hwio, window_strides=(2, 2), padding=((1, 1), (1, 1)),
        dimension_numbers=("NHWC", "HWIO", "NHWC"))
    return y + b


def _bf16r(a):
    return a.astype(jnp.bfloat16).astype(jnp.float32)


def _run_self_checks():
    k1, k2, k3 = jax.random.split(jax.random.PRNGKey(42), 3)

    # (a) sub-pixel ConvT decomposition math (pure XLA, f32, exact shapes/borders)
    x = jax.random.normal(k1, (2, 5, 7, 6), jnp.float32)
    w = jax.random.normal(k2, (6, 5, 4, 4), jnp.float32)
    b = jax.random.normal(k3, (5,), jnp.float32)
    ref = _ref_conv_transpose_nhwc(x, w, b)
    weff = _conv_transpose_weight(w)
    xp = jnp.pad(x, ((0, 0), (1, 1), (1, 1), (0, 0)))
    cols = [xp[:, i:i + 5, j:j + 7, :] for i in range(3) for j in range(3)]
    p = jnp.concatenate(cols, -1).reshape(2 * 5 * 7, 9 * 6)
    dec = (p @ weff + jnp.tile(b, 4)).reshape(2, 5, 7, 2, 2, 5)
    dec = dec.transpose(0, 1, 3, 2, 4, 5).reshape(2, 10, 14, 5)
    assert np.allclose(np.asarray(ref), np.asarray(dec), atol=1e-4, rtol=1e-4), \
        "sub-pixel ConvTranspose decomposition mismatch"

    # (b) Pallas conv2d_block with pixel folding (group=4) vs lax reference
    ic, oc, g = 8, 16, 4
    x = _bf16r(0.5 * jax.random.normal(k1, (2, 16, 16, ic), jnp.float32))
    w = _bf16r(0.2 * jax.random.normal(k2, (oc, ic, 3, 3), jnp.float32))
    b = _bf16r(0.1 * jax.random.normal(k3, (oc,), jnp.float32))
    wm = jnp.transpose(w, (2, 3, 1, 0)).reshape(9 * ic, oc)
    wm = _block_diag(wm, g).astype(jnp.bfloat16)
    bv = jnp.tile(b, g).reshape(1, -1)
    y, s, q = conv2d_block(x, wm, bv, group=g, oc=oc)
    y32 = y.astype(jnp.float32)
    ref = _ref_conv_nhwc(x, w, b)
    ref = jnp.where(ref >= 0.0, ref, 0.2 * ref)
    assert np.allclose(np.asarray(y32), np.asarray(ref), atol=2e-2), \
        "grouped Conv2d block mismatch"
    assert np.allclose(np.asarray(s), np.asarray(y32.sum(axis=(0, 1, 2))), atol=0.1), \
        "fused BN sum mismatch"
    assert np.allclose(np.asarray(q), np.asarray((y32 * y32).sum(axis=(0, 1, 2))), atol=0.1), \
        "fused BN sum-of-squares mismatch"

    # (c) Pallas conv_transpose_block with OC padding (3->4) + folding (group=8)
    ic, oc, ocpad, g = 16, 3, 4, 8
    x = _bf16r(0.5 * jax.random.normal(k2, (2, 8, 16, ic), jnp.float32))
    w = _bf16r(0.2 * jax.random.normal(k3, (ic, oc, 4, 4), jnp.float32))
    b = _bf16r(0.1 * jax.random.normal(k1, (oc,), jnp.float32))
    wp = jnp.pad(w, ((0, 0), (0, ocpad - oc), (0, 0), (0, 0)))
    bp = jnp.pad(b, (0, ocpad - oc))
    wm = _block_diag(_conv_transpose_weight(wp), g).astype(jnp.bfloat16)
    bv = jnp.tile(jnp.tile(bp, 4), g).reshape(1, -1)
    y, _, _ = conv_transpose_block(x, wm, bv, group=g, ocpad=ocpad, oc=oc,
                                   act="leaky_relu", with_stats=False,
                                   out_dtype=jnp.float32)
    ref = _ref_conv_transpose_nhwc(x, w, b)
    ref = jnp.where(ref >= 0.0, ref, 0.2 * ref)
    assert np.allclose(np.asarray(y), np.asarray(ref), atol=2e-2), \
        "padded/grouped ConvTranspose block mismatch"


if __name__ == "__main__":
    key = jax.random.PRNGKey(0)
    key, pkey, xkey, ekey = jax.random.split(key, 4)

    _run_self_checks()

    params = init_params(pkey)
    prep = jax.jit(prepare_params)(params)   # one-time weight reformat / bf16 cast
    jax.block_until_ready(prep)

    # batch=2; spatial dims are fixed by the module (flattened_dim = 512*3*6 -> 192x384)
    x = jax.random.uniform(xkey, (2, 3, 192, 384), jnp.float32)

    fwd = jax.jit(vae_forward)
    recon, mu, logvar = fwd(prep, x, ekey)
    jax.block_until_ready((recon, mu, logvar))

    assert recon.shape == (2, 3, 192, 384)
    assert mu.shape == (2, 256) and logvar.shape == (2, 256)
    assert bool(jnp.all(jnp.isfinite(recon)))
    assert bool(jnp.all((recon >= 0.0) & (recon <= 1.0)))
    assert bool(jnp.all(jnp.isfinite(mu))) and bool(jnp.all(jnp.isfinite(logvar)))
    print("KERNEL_OK")
</pallas_src>

<mosaic_0001>
module attributes {stable_mosaic.version = 11 : i64} {
  func.func @_gemm_kernel(%arg0: i32, %arg1: i32, %arg2: memref<16x288xbf16, #tpu.memory_space<vmem>>, %arg3: memref<288x64xbf16, #tpu.memory_space<vmem>>, %arg4: memref<1x64xf32, #tpu.memory_space<vmem>>, %arg5: memref<16x64xf32, #tpu.memory_space<vmem>>, %arg6: memref<1x1x64xf32, #tpu.memory_space<vmem>>, %arg7: memref<1x1x64xf32, #tpu.memory_space<vmem>>) attributes {dimension_semantics = [#tpu.dimension_semantics<parallel>, #tpu.dimension_semantics<parallel>], iteration_bounds = array<i64: 2, 1>, scalar_prefetch = 0 : i64, scratch_operands = 0 : i64, tpu.core_type = #tpu.core_type<tc>, window_params = [{transform_indices = @transform_0, window_bounds = array<i64: 16, 288>}, {transform_indices = @transform_1, window_bounds = array<i64: 288, 64>}, {transform_indices = @transform_2, window_bounds = array<i64: 1, 64>}, {transform_indices = @transform_3, window_bounds = array<i64: 16, 64>}, {transform_indices = @transform_4, window_bounds = array<i64: 1, 1, 64>}, {transform_indices = @transform_5, window_bounds = array<i64: 1, 1, 64>}]} {
    %c0 = arith.constant 0 : index
    %c0_0 = arith.constant 0 : index
    %0 = vector.load %arg2[%c0, %c0_0] : memref<16x288xbf16, #tpu.memory_space<vmem>>, vector<16x288xbf16>
    %c0_1 = arith.constant 0 : index
    %c0_2 = arith.constant 0 : index
    %1 = vector.load %arg3[%c0_1, %c0_2] : memref<288x64xbf16, #tpu.memory_space<vmem>>, vector<288x64xbf16>
    %cst = arith.constant dense<0.000000e+00> : vector<16x64xf32>
    %2 = tpu.matmul %0, %1, %cst {dimension_numbers = #tpu.dot_dimension_numbers<[1], [0], [0], [1], [0, 0, 1, 1], [], []>} : vector<16x288xbf16>, vector<288x64xbf16>, vector<16x64xf32> -> vector<16x64xf32>
    %c0_3 = arith.constant 0 : index
    %c0_4 = arith.constant 0 : index
    %3 = vector.load %arg4[%c0_3, %c0_4] : memref<1x64xf32, #tpu.memory_space<vmem>>, vector<1x64xf32>
    %4 = vector.broadcast %3 : vector<1x64xf32> to vector<16x64xf32>
    %5 = arith.addf %2, %4 : vector<16x64xf32>
    %cst_5 = arith.constant 0.000000e+00 : f32
    %6 = vector.broadcast %cst_5 : f32 to vector<16x64xf32>
    %7 = arith.cmpf oge, %5, %6 : vector<16x64xf32>
    %cst_6 = arith.constant 2.000000e-01 : f32
    %8 = vector.broadcast %cst_6 : f32 to vector<16x64xf32>
    %9 = arith.mulf %8, %5 : vector<16x64xf32>
    %10 = arith.select %7, %5, %9 : vector<16x64xi1>, vector<16x64xf32>
    %c0_7 = arith.constant 0 : index
    %c0_8 = arith.constant 0 : index
    %11 = vector.load %arg5[%c0_7, %c0_8] : memref<16x64xf32, #tpu.memory_space<vmem>>, vector<16x64xf32>
    tpu.vector_store %arg5[%c0_7, %c0_8], %10 {strides = array<i32>} : memref<16x64xf32, #tpu.memory_space<vmem>>, vector<16x64xf32>,
    %cst_9 = arith.constant dense<0.000000e+00> : vector<64xf32>
    %12 = vector.multi_reduction <add>, %10, %cst_9 [0] : vector<16x64xf32> to vector<64xf32>
    %13 = vector.shape_cast %12 : vector<64xf32> to vector<1x64xf32>
    %14 = vector.shape_cast %13 : vector<1x64xf32> to vector<1x1x64xf32>
    %c0_10 = arith.constant 0 : index
    %c0_11 = arith.constant 0 : index
    %c0_12 = arith.constant 0 : index
    %15 = vector.load %arg6[%c0_10, %c0_11, %c0_12] : memref<1x1x64xf32, #tpu.memory_space<vmem>>, vector<1x1x64xf32>
    tpu.vector_store %arg6[%c0_10, %c0_11, %c0_12], %14 {strides = array<i32>} : memref<1x1x64xf32, #tpu.memory_space<vmem>>, vector<1x1x64xf32>,
    %16 = arith.mulf %10, %10 : vector<16x64xf32>
    %cst_13 = arith.constant dense<0.000000e+00> : vector<64xf32>
    %17 = vector.multi_reduction <add>, %16, %cst_13 [0] : vector<16x64xf32> to vector<64xf32>
    %18 = vector.shape_cast %17 : vector<64xf32> to vector<1x64xf32>
    %19 = vector.shape_cast %18 : vector<1x64xf32> to vector<1x1x64xf32>
    %c0_14 = arith.constant 0 : index
    %c0_15 = arith.constant 0 : index
    %c0_16 = arith.constant 0 : index
    %20 = vector.load %arg7[%c0_14, %c0_15, %c0_16] : memref<1x1x64xf32, #tpu.memory_space<vmem>>, vector<1x1x64xf32>
    tpu.vector_store %arg7[%c0_14, %c0_15, %c0_16], %19 {strides = array<i32>} : memref<1x1x64xf32, #tpu.memory_space<vmem>>, vector<1x1x64xf32>,
    return
  }
  func.func @transform_0(%arg0: i32, %arg1: i32) -> (i32, i32) {
    %c0_i32 = arith.constant 0 : i32
    %c0_i32_0 = arith.constant 0 : i32
    return %arg0, %c0_i32 : i32, i32
  }
  func.func @transform_1(%arg0: i32, %arg1: i32) -> (i32, i32) {
    %c0_i32 = arith.constant 0 : i32
    %c0_i32_0 = arith.constant 0 : i32
    return %c0_i32, %arg1 : i32, i32
  }
  func.func @transform_2(%arg0: i32, %arg1: i32) -> (i32, i32) {
    %c0_i32 = arith.constant 0 : i32
    %c0_i32_0 = arith.constant 0 : i32
    return %c0_i32, %arg1 : i32, i32
  }
  func.func @transform_3(%arg0: i32, %arg1: i32) -> (i32, i32) {
    %c0_i32 = arith.constant 0 : i32
    return %arg0, %arg1 : i32, i32
  }
  func.func @transform_4(%arg0: i32, %arg1: i32) -> (i32, i32, i32) {
    %c0_i32 = arith.constant 0 : i32
    %c0_i32_0 = arith.constant 0 : i32
    return %arg0, %c0_i32, %arg1 : i32, i32, i32
  }
  func.func @transform_5(%arg0: i32, %arg1: i32) -> (i32, i32, i32) {
    %c0_i32 = arith.constant 0 : i32
    %c0_i32_0 = arith.constant 0 : i32
    return %arg0, %c0_i32, %arg1 : i32, i32, i32
  }
}

</mosaic_0001>

<llo_original>
// kernel: tpu_custom_call.1
$region0: #{tpu_custom_call.1}
  #allocation0 [shape = 'u32[]', space=smem, size = 0x4, offset = 0x4, fixed_abs, tag = 'smem constant byte address 0x4 - core index']
  #allocation1 [shape = 'u32[144,128]{1,0:T(1,128)}', space=vmem, size = 0x12000, scoped, tag = 'internal scratch']
  %s0 = inlined_call_operand.vmem [shape: bf16[32,288], index: 0, kind: input, shape index: {}]
  %s1 = inlined_call_operand.vmem [shape: bf16[288,64], index: 1, kind: input, shape index: {}]
  %s2 = inlined_call_operand.vmem [shape: f32[1,64], index: 2, kind: input, shape index: {}]
  %s3 = inlined_call_operand.hbm [shape: f32[32,64], index: 3, kind: output, shape index: {0}]
  %s4 = inlined_call_operand.hbm [shape: f32[2,1,64], index: 4, kind: output, shape index: {1}]
  %s5 = inlined_call_operand.hbm [shape: f32[2,1,64], index: 5, kind: output, shape index: {2}]
  %6 = xla_tuple %s3, %s4, %s5
  %s7 = sld [smem:[#allocation0]]
  $region61: #{tpu_custom_call.1} parent=0
    _
  %s9 = ssub.s32 1, %s7
  %s10 = scalar_select 0, %s9, %s7
  $region1: #{tpu_custom_call.1} parent=0
    #allocation2 [shape = 'u8[16384]{0}', space=vmem, size = 0x4000, scoped, tag = 'output window, operand 0']
    #allocation3 [shape = 's32[2]{0}', space=sflag, size = 0x8, scoped, tag = 'scoped memory for tpu_custom_call.1']
    #allocation4 [shape = 'u8[1024]{0}', space=vmem, size = 0x400, scoped, tag = 'output window, operand 1']
    #allocation5 [shape = 's32[2]{0}', space=sflag, size = 0x8, scoped, tag = 'scoped memory for tpu_custom_call.1']
    #allocation6 [shape = 'u8[1024]{0}', space=vmem, size = 0x400, scoped, tag = 'output window, operand 2']
    %11 = vsyncpa [#allocation3], 0
    %s12 = scalar_lea.sflag [#allocation3], 1
    %13 = vsyncpa %s12, 0
    %14 = vsyncpa [#allocation5], 0
    %s15 = scalar_lea.sflag [#allocation5], 1
    %16 = vsyncpa %s15, 0
    loop: start=0, step=1, limit=4
    $region2: #{tpu_custom_call.1} parent=1 // loop_pre_header
      _
    $region3: #{tpu_custom_call.1} parent=1 // loop_header
      %s18 = sphi 0, %s22
      %p19 = scmp.ge.s32.totalorder %s18, 4
      %s25 = sphi 0, %s37
      %s26 = sphi 0, %s33
      %s27 = sphi 0, %s25
      %s28 = sphi 0, %s26
      %s29 = sphi 0, %s27
      %s30 = sphi 0, %s28
      %s40 = sphi 0, %s42
      %s43 = sphi 0, %s40
      %s44 = sphi 0, %s43
      %s60 = sphi 0, %s44
      %s66 = sphi 0, %s68
      %s69 = sphi 0, %s66
      %s70 = sphi 0, %s69
      %s86 = sphi 0, %s70
      %s92 = sphi 0, %s94
      %s95 = sphi 0, %s92
      %s96 = sphi 0, %s95
      %s112 = sphi 0, %s96
      %s120 = sphi 0, %s122
      %s123 = sphi 0, %s120
      %s124 = sphi 0, %s123
      %s140 = sphi 0, %s124
      %s148 = sphi 0, %s150
      %s151 = sphi 0, %s148
      %s152 = sphi 0, %s151
      %s168 = sphi 0, %s152
      %s176 = sphi 0, %s178
      %s179 = sphi 0, %s176
      %s180 = sphi 0, %s179
      %s196 = sphi 0, %s180
    $region4: #{tpu_custom_call.1} parent=1 // loop_header_branch
      %21 = sbr.rel (%p19) target = $region8
    $region5: #{tpu_custom_call.1} parent=1 // loop_body
      %s23 = ssub.s32 %s18, 1
      %s24 = ssub.s32 %s18, 2
      %s31 = sadd.s32 1, %s26
      %p32 = scmp.ge.s32.totalorder %s31, 1
      %s33 = scalar_select %p32, 0, %s31
      %s34 = sadd.s32 1, %s25
      %s35 = scalar_select %p32, %s34, %s25
      %p36 = scmp.ge.s32.totalorder %s35, 2
      %s37 = scalar_select %p36, 0, %s35
      %s38 = ssub.s32 %s25, %s37
      %p39 = scmp.eq.s32.totalorder %s38, 0
      %s41 = sadd.s32 %s40, 1
      %s42 = scalar_select %p39, %s40, %s41
      %p45 = pneg %p39
      %p46 = scmp.eq.s32.totalorder %s18, 1
      %p47 = por %p45, %p46
      %p48 = scmp.ne.s32.totalorder %s40, %s43
      %p49 = scmp.eq.s32.totalorder %s18, 0
      %p50 = por %p48, %p49
      %p51 = scmp.ne.s32.totalorder %s40, %s43
      %p52 = scmp.eq.s32.totalorder %s23, 1
      %p53 = por %p51, %p52
      %p54 = scmp.ne.s32.totalorder %s43, %s44
      %p55 = scmp.eq.s32.totalorder %s23, 0
      %p56 = por %p54, %p55
      %p57 = scmp.ne.s32.totalorder %s43, %s44
      %p58 = scmp.eq.s32.totalorder %s24, 1
      %p59 = por %p57, %p58
      %p61 = scmp.ne.s32.totalorder %s44, %s60
      %p62 = scmp.eq.s32.totalorder %s24, 0
      %p63 = por %p61, %p62
      %s64 = ssub.s32 %s26, %s33
      %p65 = scmp.eq.s32.totalorder %s64, 0
      %s67 = sadd.s32 %s66, 1
      %s68 = scalar_select %p65, %s66, %s67
      %p71 = pneg %p65
      %p72 = scmp.eq.s32.totalorder %s18, 1
      %p73 = por %p71, %p72
      %p74 = scmp.ne.s32.totalorder %s66, %s69
      %p75 = scmp.eq.s32.totalorder %s18, 0
      %p76 = por %p74, %p75
      %p77 = scmp.ne.s32.totalorder %s66, %s69
      %p78 = scmp.eq.s32.totalorder %s23, 1
      %p79 = por %p77, %p78
      %p80 = scmp.ne.s32.totalorder %s69, %s70
      %p81 = scmp.eq.s32.totalorder %s23, 0
      %p82 = por %p80, %p81
      %p83 = scmp.ne.s32.totalorder %s69, %s70
      %p84 = scmp.eq.s32.totalorder %s24, 1
      %p85 = por %p83, %p84
      %p87 = scmp.ne.s32.totalorder %s70, %s86
      %p88 = scmp.eq.s32.totalorder %s24, 0
      %p89 = por %p87, %p88
      %s90 = ssub.s32 %s26, %s33
      %p91 = scmp.eq.s32.totalorder %s90, 0
      %s93 = sadd.s32 %s92, 1
      %s94 = scalar_select %p91, %s92, %s93
      %p97 = pneg %p91
      %p98 = scmp.eq.s32.totalorder %s18, 1
      %p99 = por %p97, %p98
      %p100 = scmp.ne.s32.totalorder %s92, %s95
      %p101 = scmp.eq.s32.totalorder %s18, 0
      %p102 = por %p100, %p101
      %p103 = scmp.ne.s32.totalorder %s92, %s95
      %p104 = scmp.eq.s32.totalorder %s23, 1
      %p105 = por %p103, %p104
      %p106 = scmp.ne.s32.totalorder %s95, %s96
      %p107 = scmp.eq.s32.totalorder %s23, 0
      %p108 = por %p106, %p107
      %p109 = scmp.ne.s32.totalorder %s95, %s96
      %p110 = scmp.eq.s32.totalorder %s24, 1
      %p111 = por %p109, %p110
      %p113 = scmp.ne.s32.totalorder %s96, %s112
      %p114 = scmp.eq.s32.totalorder %s24, 0
      %p115 = por %p113, %p114
      %s116 = ssub.s32 %s25, %s37
      %s117 = ssub.s32 %s26, %s33
      %s118 = sor.u32 %s116, %s117
      %p119 = scmp.eq.s32.totalorder %s118, 0
      %s121 = sadd.s32 %s120, 1
      %s122 = scalar_select %p119, %s120, %s121
      %p125 = pneg %p119
      %p126 = scmp.eq.s32.totalorder %s18, 1
      %p127 = por %p125, %p126
      %p128 = scmp.ne.s32.totalorder %s120, %s123
      %p129 = scmp.eq.s32.totalorder %s18, 0
      %p130 = por %p128, %p129
      %p131 = scmp.ne.s32.totalorder %s120, %s123
      %p132 = scmp.eq.s32.totalorder %s23, 1
      %p133 = por %p131, %p132
      %p134 = scmp.ne.s32.totalorder %s123, %s124
      %p135 = scmp.eq.s32.totalorder %s23, 0
      %p136 = por %p134, %p135
      %p137 = scmp.ne.s32.totalorder %s123, %s124
      %p138 = scmp.eq.s32.totalorder %s24, 1
      %p139 = por %p137, %p138
      %p141 = scmp.ne.s32.totalorder %s124, %s140
      %p142 = scmp.eq.s32.totalorder %s24, 0
      %p143 = por %p141, %p142
      %s144 = ssub.s32 %s25, %s37
      %s145 = ssub.s32 %s26, %s33
      %s146 = sor.u32 %s144, %s145
      %p147 = scmp.eq.s32.totalorder %s146, 0
      %s149 = sadd.s32 %s148, 1
      %s150 = scalar_select %p147, %s148, %s149
      %p153 = pneg %p147
      %p154 = scmp.eq.s32.totalorder %s18, 1
      %p155 = por %p153, %p154
      %p156 = scmp.ne.s32.totalorder %s148, %s151
      %p157 = scmp.eq.s32.totalorder %s18, 0
      %p158 = por %p156, %p157
      %p159 = scmp.ne.s32.totalorder %s148, %s151
      %p160 = scmp.eq.s32.totalorder %s23, 1
      %p161 = por %p159, %p160
      %p162 = scmp.ne.s32.totalorder %s151, %s152
      %p163 = scmp.eq.s32.totalorder %s23, 0
      %p164 = por %p162, %p163
      %p165 = scmp.ne.s32.totalorder %s151, %s152
      %p166 = scmp.eq.s32.totalorder %s24, 1
      %p167 = por %p165, %p166
      %p169 = scmp.ne.s32.totalorder %s152, %s168
      %p170 = scmp.eq.s32.totalorder %s24, 0
      %p171 = por %p169, %p170
      %s172 = ssub.s32 %s25, %s37
      %s173 = ssub.s32 %s26, %s33
      %s174 = sor.u32 %s172, %s173
      %p175 = scmp.eq.s32.totalorder %s174, 0
      %s177 = sadd.s32 %s176, 1
      %s178 = scalar_select %p175, %s176, %s177
      %p181 = pneg %p175
      %p182 = scmp.eq.s32.totalorder %s18, 1
      %p183 = por %p181, %p182
      %p184 = scmp.ne.s32.totalorder %s176, %s179
      %p185 = scmp.eq.s32.totalorder %s18, 0
      %p186 = por %p184, %p185
      %p187 = scmp.ne.s32.totalorder %s176, %s179
      %p188 = scmp.eq.s32.totalorder %s23, 1
      %p189 = por %p187, %p188
      %p190 = scmp.ne.s32.totalorder %s179, %s180
      %p191 = scmp.eq.s32.totalorder %s23, 0
      %p192 = por %p190, %p191
      %p193 = scmp.ne.s32.totalorder %s179, %s180
      %p194 = scmp.eq.s32.totalorder %s24, 1
      %p195 = por %p193, %p194
      %p197 = scmp.ne.s32.totalorder %s180, %s196
      %p198 = scmp.eq.s32.totalorder %s24, 0
      %p199 = por %p197, %p198
      %p200 = scmp.le.s32.totalorder 1, %s18
      %p201 = scmp.lt.s32.totalorder %s18, 3
      %p202 = pnand %p200, %p201
      %p203 = pneg %p202
      // Predicated region
      $region9: #{tpu_custom_call.1} parent=5 // pred_check
        _
      $region10: #{tpu_custom_call.1} parent=5 // pred_check_branch
        %205 = sbr.rel (%p202) target = $region12
      $region11: #{tpu_custom_call.1} parent=5 // pred_region
        %s206 = ssub.s32 %s18, 1
        // Predicated region
        $region13: #{tpu_custom_call.1} parent=11 // pred_check
          %p207 = pneg %p82
        $region14: #{tpu_custom_call.1} parent=11 // pred_check_branch
          %209 = sbr.rel (%p207) target = $region16
        $region15: #{tpu_custom_call.1} parent=11 // pred_region
          %p210 = scmp.lt.s32.totalorder %s28, 0
          %s211 = scalar_select %p210, %s28, 0
          %s212 = smul.addr %s211, 4
          %s213 = scalar_lea.vmem %s1, %s212
        $region16: #{tpu_custom_call.1} parent=11 // pred_fallthru
          _
        // Predicated region
        $region17: #{tpu_custom_call.1} parent=11 // pred_check
          %p214 = pneg %p108
        $region18: #{tpu_custom_call.1} parent=11 // pred_check_branch
          %216 = sbr.rel (%p214) target = $region20
        $region19: #{tpu_custom_call.1} parent=11 // pred_region
          %p217 = scmp.lt.s32.totalorder %s28, 0
          %s218 = scalar_select %p217, %s28, 0
          %s219 = scalar_lea.vmem %s2, %s218
        $region20: #{tpu_custom_call.1} parent=11 // pred_fallthru
          _
      $region12: #{tpu_custom_call.1} parent=5 // pred_fallthru
        _
      %p220 = scmp.lt.s32.totalorder %s18, 2
      // Predicated region
      $region21: #{tpu_custom_call.1} parent=5 // pred_check
        %p221 = pneg %p220
      $region22: #{tpu_custom_call.1} parent=5 // pred_check_branch
        %223 = sbr.rel (%p221) target = $region24
      $region23: #{tpu_custom_call.1} parent=5 // pred_region
        // Predicated region
        $region25: #{tpu_custom_call.1} parent=23 // pred_check
          %p224 = pneg %p50
        $region26: #{tpu_custom_call.1} parent=23 // pred_check_branch
          %226 = sbr.rel (%p224) target = $region28
        $region27: #{tpu_custom_call.1} parent=23 // pred_region
          %s227 = smul.u32 2, %s25
          %p228 = scmp.lt.s32.totalorder %s227, 3
          %s229 = scalar_select %p228, %s227, 3
          %s230 = smul.addr %s229, 3
          %s231 = smul.addr %s230, 4
          %s232 = scalar_lea.vmem %s0, %s231
          %s233 = smul.u32 2, %s25
        $region28: #{tpu_custom_call.1} parent=23 // pred_fallthru
          _
      $region24: #{tpu_custom_call.1} parent=5 // pred_fallthru
        _
      %p234 = scmp.le.s32.totalorder 1, %s18
      %p235 = scmp.lt.s32.totalorder %s18, 3
      %p236 = pnand %p234, %p235
      %p237 = pneg %p236
      // Predicated region
      $region29: #{tpu_custom_call.1} parent=5 // pred_check
        _
      $region30: #{tpu_custom_call.1} parent=5 // pred_check_branch
        %239 = sbr.rel (%p236) target = $region32
      $region31: #{tpu_custom_call.1} parent=5 // pred_region
        %s240 = ssub.s32 %s18, 1
        %s241 = smul.u32 2, %s27
        %p242 = scmp.lt.s32.totalorder %s241, 3
        %s243 = scalar_select %p242, %s241, 3
        %s244 = smul.addr %s243, 3
        %s245 = smul.addr %s244, 4
        %s246 = scalar_lea.vmem %s0, %s245
        %p247 = pneg %p56
        %p248 = pneg %p53
        %p249 = scmp.lt.s32.totalorder %s28, 0
        %s250 = scalar_select %p249, %s28, 0
        %s251 = smul.addr %s250, 4
        %s252 = scalar_lea.vmem %s1, %s251
        %p253 = pneg %p82
        %p254 = pneg %p79
        %p255 = scmp.lt.s32.totalorder %s28, 0
        %s256 = scalar_select %p255, %s28, 0
        %s257 = scalar_lea.vmem %s2, %s256
        %p258 = pneg %p108
        %p259 = pneg %p105
        %p260 = pneg %p136
        %p261 = pneg %p133
        %s262 = sand.u32 %s123, 1
        %s263 = scalar_lea.sflag [#allocation3], %s262
        %s264 = sand.u32 %s123, 1
        %s265 = smul.addr %s264, 16
        %s266 = scalar_lea.vmem [#allocation2], %s265
        %p267 = pneg %p164
        %p268 = pneg %p161
        %s269 = sand.u32 %s23, 1
        %s270 = scalar_lea.sflag [#allocation5], %s269
        %s271 = sand.u32 %s151, 1
        %s272 = scalar_lea.vmem [#allocation4], %s271
        %p273 = pneg %p192
        %p274 = pneg %p189
        %s275 = sand.u32 %s23, 1
        %s276 = scalar_lea.sflag [#allocation5], %s275
        %s277 = sand.u32 %s179, 1
        %s278 = scalar_lea.vmem [#allocation6], %s277
        %s279 = smul.u32 2, %s27
        %p280 = scmp.lt.s32.totalorder %s279, 3
        %s281 = scalar_select %p280, %s279, 3
        %s282 = smul.addr %s281, 3
        %s283 = smul.addr %s282, 4
        %s284 = scalar_lea.vmem %s0, %s283
        %s285 = smul.u32 2, %s27
        %p286 = scmp.lt.s32.totalorder %s28, 0
        %s287 = scalar_select %p286, %s28, 0
        %s288 = smul.addr %s287, 4
        %s289 = scalar_lea.vmem %s1, %s288
        %p290 = scmp.lt.s32.totalorder %s28, 0
        %s291 = scalar_select %p290, %s28, 0
        %s292 = scalar_lea.vmem %s2, %s291
        %s293 = smul.u32 2, %s27
        %v295 = vld [vmem:[%s284] sm:$0xff]
        %v296 = vld [vmem:[%s284 + $0x8] sm:$0xf]
        %v297 = vld [vmem:[%s284 + $0xc] sm:$0xff]
        %v298 = vld [vmem:[%s284 + $0x14] sm:$0xf]
        %v299 = vld [vmem:[%s289] sm:$0xf]
        %v300 = vld [vmem:[%s289 + $0x4] sm:$0xf]
        %v301 = vld [vmem:[%s289 + $0x8] sm:$0xf]
        %v302 = vld [vmem:[%s289 + $0xc] sm:$0xf]
        %v303 = vld [vmem:[%s289 + $0x10] sm:$0xf]
        %v304 = vld [vmem:[%s289 + $0x14] sm:$0xf]
        %v305 = vld [vmem:[%s289 + $0x18] sm:$0xf]
        %v306 = vld [vmem:[%s289 + $0x1c] sm:$0xf]
        %v307 = vld [vmem:[%s289 + $0x20] sm:$0xf]
        %v308 = vld [vmem:[%s289 + $0x24] sm:$0xf]
        %v309 = vld [vmem:[%s289 + $0x28] sm:$0xf]
        %v310 = vld [vmem:[%s289 + $0x2c] sm:$0xf]
        %v311 = vld [vmem:[%s289 + $0x30] sm:$0xf]
        %v312 = vld [vmem:[%s289 + $0x34] sm:$0xf]
        %v313 = vld [vmem:[%s289 + $0x38] sm:$0xf]
        %v314 = vld [vmem:[%s289 + $0x3c] sm:$0xf]
        %v315 = vld [vmem:[%s289 + $0x40] sm:$0xf]
        %v316 = vld [vmem:[%s289 + $0x44] sm:$0xf]
        %v317 = vld [vmem:[%s289 + $0x48] sm:$0xf]
        %v318 = vld [vmem:[%s289 + $0x4c] sm:$0xf]
        %v319 = vld [vmem:[%s289 + $0x50] sm:$0xf]
        %v320 = vld [vmem:[%s289 + $0x54] sm:$0xf]
        %v321 = vld [vmem:[%s289 + $0x58] sm:$0xf]
        %v322 = vld [vmem:[%s289 + $0x5c] sm:$0xf]
        %v323 = vld [vmem:[%s289 + $0x60] sm:$0xf]
        %v324 = vld [vmem:[%s289 + $0x64] sm:$0xf]
        %v325 = vld [vmem:[%s289 + $0x68] sm:$0xf]
        %v326 = vld [vmem:[%s289 + $0x6c] sm:$0xf]
        %v327 = vld [vmem:[%s289 + $0x70] sm:$0xf]
        %v328 = vld [vmem:[%s289 + $0x74] sm:$0xf]
        %v329 = vld [vmem:[%s289 + $0x78] sm:$0xf]
        %v330 = vld [vmem:[%s289 + $0x7c] sm:$0xf]
        %v331 = vld [vmem:[%s289 + $0x80] sm:$0xf]
        %v332 = vld [vmem:[%s289 + $0x84] sm:$0xf]
        %v333 = vld [vmem:[%s289 + $0x88] sm:$0xf]
        %v334 = vld [vmem:[%s289 + $0x8c] sm:$0xf]
        %v335 = vld [vmem:[%s292] sm:$0x1]
        %v337 = vlaneseq
        %v338 = vshrl.u32 %v337, 7
        %v339 = vsub.s32 0, %v338
        %v340 = vrot.slane %v335, %v339
        %v346 = vunpack.c.l.b16 %v295
        %v347 = vunpack.c.h.b16 %v295
        %v348 = vunpack.c.l.b16 %v296
        %v349 = vunpack.c.l.b16 %v297
        %v350 = vunpack.c.h.b16 %v297
        %v351 = vunpack.c.l.b16 %v298
        %v352 = vpack.c.b16 %v349, %v346
        %v353 = vpack.c.b16 %v350, %v347
        %v354 = vpack.c.b16 %v351, %v348
        %v393 = vunpack.c.l.b16 %v299
        %v394 = vunpack.c.l.b16 %v300
        %v395 = vunpack.c.l.b16 %v301
        %v396 = vunpack.c.l.b16 %v302
        %v397 = vunpack.c.l.b16 %v303
        %v398 = vunpack.c.l.b16 %v304
        %v399 = vunpack.c.l.b16 %v305
        %v400 = vunpack.c.l.b16 %v306
        %v401 = vunpack.c.l.b16 %v307
        %v402 = vunpack.c.l.b16 %v308
        %v403 = vunpack.c.l.b16 %v309
        %v404 = vunpack.c.l.b16 %v310
        %v405 = vunpack.c.l.b16 %v311
        %v406 = vunpack.c.l.b16 %v312
        %v407 = vunpack.c.l.b16 %v313
        %v408 = vunpack.c.l.b16 %v314
        %v409 = vunpack.c.l.b16 %v315
        %v410 = vunpack.c.l.b16 %v316
        %v411 = vunpack.c.l.b16 %v317
        %v412 = vunpack.c.l.b16 %v318
        %v413 = vunpack.c.l.b16 %v319
        %v414 = vunpack.c.l.b16 %v320
        %v415 = vunpack.c.l.b16 %v321
        %v416 = vunpack.c.l.b16 %v322
        %v417 = vunpack.c.l.b16 %v323
        %v418 = vunpack.c.l.b16 %v324
        %v419 = vunpack.c.l.b16 %v325
        %v420 = vunpack.c.l.b16 %v326
        %v421 = vunpack.c.l.b16 %v327
        %v422 = vunpack.c.l.b16 %v328
        %v423 = vunpack.c.l.b16 %v329
        %v424 = vunpack.c.l.b16 %v330
        %v425 = vunpack.c.l.b16 %v331
        %v426 = vunpack.c.l.b16 %v332
        %v427 = vunpack.c.l.b16 %v333
        %v428 = vunpack.c.l.b16 %v334
        %v429 = vpack.c.b16 %v394, %v393
        %v430 = vpack.c.b16 %v396, %v395
        %v431 = vpack.c.b16 %v398, %v397
        %v432 = vpack.c.b16 %v400, %v399
        %v433 = vpack.c.b16 %v402, %v401
        %v434 = vpack.c.b16 %v404, %v403
        %v435 = vpack.c.b16 %v406, %v405
        %v436 = vpack.c.b16 %v408, %v407
        %v437 = vpack.c.b16 %v410, %v409
        %v438 = vpack.c.b16 %v412, %v411
        %v439 = vpack.c.b16 %v414, %v413
        %v440 = vpack.c.b16 %v416, %v415
        %v441 = vpack.c.b16 %v418, %v417
        %v442 = vpack.c.b16 %v420, %v419
        %v443 = vpack.c.b16 %v422, %v421
        %v444 = vpack.c.b16 %v424, %v423
        %v445 = vpack.c.b16 %v426, %v425
        %v446 = vpack.c.b16 %v428, %v427
        %vm465 = vcmask 261120
        %v467 = vsel %vm465, %v354, 0
        %469 = vmatprep.subr.bf16.mxu0 0
        %470 = vmatpush1.bf16.msra.mxu0 %v429
        %471 = vmatprep.subr.bf16.mxu0 0
        %472 = vmatpush1.bf16.msra.mxu0 %v430
        %473 = vmatprep.subr.bf16.mxu0 0
        %474 = vmatpush1.bf16.msra.mxu0 %v431
        %475 = vmatprep.subr.bf16.mxu0 0
        %476 = vmatpush1.bf16.msra.mxu0 %v432
        %477 = vmatprep.subr.bf16.mxu0 0
        %478 = vmatpush1.bf16.msra.mxu0 %v433
        %479 = vmatprep.subr.bf16.mxu0 0
        %480 = vmatpush1.bf16.msra.mxu0 %v434
        %481 = vmatprep.subr.bf16.mxu0 0
        %482 = vmatpush1.bf16.msra.mxu0 %v435
        %483 = vmatprep.subr.bf16.mxu0 0
        %484 = vmatpush1.bf16.msra.mxu0 %v436
        %485 = vmatprep.subr.bf16.mxu0 0
        %486 = vmatpush1.bf16.msra.mxu0 %v437
        %487 = vmatprep.subr.bf16.mxu0 0
        %488 = vmatpush1.bf16.msra.mxu0 %v438
        %489 = vmatprep.subr.bf16.mxu0 0
        %490 = vmatpush1.bf16.msra.mxu0 %v439
        %491 = vmatprep.subr.bf16.mxu0 0
        %492 = vmatpush1.bf16.msra.mxu0 %v440
        %493 = vmatprep.subr.bf16.mxu0 0
        %494 = vmatpush1.bf16.msra.mxu0 %v441
        %495 = vmatprep.subr.bf16.mxu0 0
        %496 = vmatpush1.bf16.msra.mxu0 %v442
        %497 = vmatprep.subr.bf16.mxu0 0
        %498 = vmatpush1.bf16.msra.mxu0 %v443
        %499 = vmatprep.subr.bf16.mxu0 0
        %500 = vmatpush1.bf16.msra.mxu0 %v444
        %501 = vmatprep.mubr.bf16.mxu0 %v353
        %502 = vmatmul.mubr.bf16.gmra.mrb[0].mxu0 %v352
        %v503 = vpop.f32.mrb[0].mxu0
        %v504 = vadd.f32 %v340, %v503
        %v505 = vpop.f32.mrb[0].mxu0
        %v506 = vpop.f32.mrb[0].mxu0
        %v507 = vadd.f32 %v340, %v506
        %v508 = vpop.f32.mrb[0].mxu0
        %509 = vdwg.mxu0
        %510 = vmatprep.subr.bf16.mxu0 0
        %511 = vmatpush1.bf16.msra.mxu0 %v445
        %512 = vmatprep.subr.bf16.mxu0 0
        %513 = vmatpush1.bf16.msra.mxu0 %v446
        %514 = vmatprep.subr.bf16.mxu0 0
        %515 = vmatpush1.bf16.msra.mxu0 0
        %516 = vmatprep.subr.bf16.mxu0 0
        %517 = vmatpush1.bf16.msra.mxu0 0
        %518 = vmatprep.subr.bf16.mxu0 0
        %519 = vmatpush1.bf16.msra.mxu0 0
        %520 = vmatprep.subr.bf16.mxu0 0
        %521 = vmatpush1.bf16.msra.mxu0 0
        %522 = vmatprep.subr.bf16.mxu0 0
        %523 = vmatpush1.bf16.msra.mxu0 0
        %524 = vmatprep.subr.bf16.mxu0 0
        %525 = vmatpush1.bf16.msra.mxu0 0
        %526 = vmatprep.subr.bf16.mxu0 0
        %527 = vmatpush1.bf16.msra.mxu0 0
        %528 = vmatprep.subr.bf16.mxu0 0
        %529 = vmatpush1.bf16.msra.mxu0 0
        %530 = vmatprep.subr.bf16.mxu0 0
        %531 = vmatpush1.bf16.msra.mxu0 0
        %532 = vmatprep.subr.bf16.mxu0 0
        %533 = vmatpush1.bf16.msra.mxu0 0
        %534 = vmatprep.subr.bf16.mxu0 0
        %535 = vmatpush1.bf16.msra.mxu0 0
        %536 = vmatprep.subr.bf16.mxu0 0
        %537 = vmatpush1.bf16.msra.mxu0 0
        %538 = vmatprep.subr.bf16.mxu0 0
        %539 = vmatpush1.bf16.msra.mxu0 0
        %540 = vmatprep.subr.bf16.mxu0 0
        %541 = vmatpush1.bf16.msra.mxu0 0
        %542 = vmatprep.mubr.bf16.mxu0 0
        %543 = vmatmul.mubr.bf16.gmra.mrb[0].mxu0 %v467
        %v544 = vpop.f32.mrb[0].mxu0
        %v545 = vadd.f32 %v504, %v544
        %v546 = vpop.f32.mrb[0].mxu0
        %v547 = vpop.f32.mrb[0].mxu0
        %v548 = vadd.f32 %v507, %v547
        %v549 = vpop.f32.mrb[0].mxu0
        %550 = vdwg.mxu0
        %vm551 = vcmp.ge.f32.partialorder %v545, 0.0
        %vm552 = vcmp.ge.f32.partialorder %v548, 0.0
        %v553 = vmul.f32 %v545, 0.2
        %v554 = vmul.f32 %v548, 0.2
        %v555 = vsel %vm551, %v545, %v553
        %v556 = vsel %vm552, %v548, %v554
        %vm557 = vcmask 523264
        %558 = vst.msk [vmem:[%s266] sm:$0xff] %vm557, %v555
        %559 = vst.msk [vmem:[%s266 + $0x8] sm:$0xff] %vm557, %v556
        %v560 = vsel %vm557, %v555, 0.0
        %v561 = vsel %vm557, %v556, 0.0
        %v562 = vadd.f32 %v560, %v561
        %v563 = vrot.slane %v562, 4
        %v564 = vadd.f32 %v562, %v563
        %v565 = vrot.slane %v564, 2
        %v566 = vadd.f32 %v564, %v565
        %v567 = vrot.slane %v566, 1
        %v568 = vadd.f32 %v566, %v567
        %vm569 = vcmask 516096
        %570 = vst.msk [vmem:[%s272] sm:$0x1] %vm569, %v568
        %v571 = vmul.f32 %v555, %v555
        %v572 = vmul.f32 %v556, %v556
        %v573 = vsel %vm557, %v571, 0.0
        %v574 = vsel %vm557, %v572, 0.0
        %v575 = vadd.f32 %v573, %v574
        %v576 = vrot.slane %v575, 4
        %v577 = vadd.f32 %v575, %v576
        %v578 = vrot.slane %v577, 2
        %v579 = vadd.f32 %v577, %v578
        %v580 = vrot.slane %v579, 1
        %v581 = vadd.f32 %v579, %v580
        %582 = vst.msk [vmem:[%s278] sm:$0x1] %vm569, %v581
        %s583 = sand.u32 %s123, 1
        %s584 = scalar_lea.sflag [#allocation3], %s583
        %s585 = sand.u32 %s123, 1
        %s586 = smul.addr %s585, 16
        %s587 = scalar_lea.vmem [#allocation2], %s586
        %s588 = sand.u32 %s23, 1
        %s589 = scalar_lea.sflag [#allocation5], %s588
        %s590 = sand.u32 %s151, 1
        %s591 = scalar_lea.vmem [#allocation4], %s590
        %s592 = sand.u32 %s23, 1
        %s593 = scalar_lea.sflag [#allocation5], %s592
        %s594 = sand.u32 %s179, 1
        %s595 = scalar_lea.vmem [#allocation6], %s594
        // Predicated region
        $region33: #{tpu_custom_call.1} parent=31 // pred_check
          %p596 = pneg %p133
        $region34: #{tpu_custom_call.1} parent=31 // pred_check_branch
          %598 = sbr.rel (%p596) target = $region36
        $region35: #{tpu_custom_call.1} parent=31 // pred_region
          %s599 = smul.u32 2, %s27
          %s601 = ssub.s32 256, 256
          %602 = vsyncadd %s584, %s601
          %s603 = sadd.s32 %s28, %s599
          %s604 = smul.addr %s603, 128
          %s605 = scalar_lea.hbm %s3, %s604
          %s606 = sshll.u32 %s587, 4
          %s607 = int_to_ptr.vmem [resolvable:$true] %s606
          %612 = dma.vmem_to_hbm [thread:$0]  %s607, 256, %s605, %s584, 128, 128, 8
        $region36: #{tpu_custom_call.1} parent=31 // pred_fallthru
          _
        // Predicated region
        $region37: #{tpu_custom_call.1} parent=31 // pred_check
          %p613 = pneg %p161
        $region38: #{tpu_custom_call.1} parent=31 // pred_check_branch
          %615 = sbr.rel (%p613) target = $region40
        $region39: #{tpu_custom_call.1} parent=31 // pred_region
          %s617 = ssub.s32 16, 16
          %618 = vsyncadd %s589, %s617
          %s619 = sadd.s32 %s28, %s27
          %s620 = smul.addr %s619, 16
          %s621 = scalar_lea.hbm %s4, %s620
          %s623 = sshll.u32 %s591, 4
          %s624 = int_to_ptr.vmem [resolvable:$true] %s623
          %626 = dma.vmem_to_hbm [thread:$0]  %s624, 16, %s621, %s589
        $region40: #{tpu_custom_call.1} parent=31 // pred_fallthru
          _
        // Predicated region
        $region41: #{tpu_custom_call.1} parent=31 // pred_check
          %p627 = pneg %p189
        $region42: #{tpu_custom_call.1} parent=31 // pred_check_branch
          %629 = sbr.rel (%p627) target = $region44
        $region43: #{tpu_custom_call.1} parent=31 // pred_region
          %s631 = ssub.s32 16, 16
          %632 = vsyncadd %s593, %s631
          %s633 = sadd.s32 %s28, %s27
          %s634 = smul.addr %s633, 16
          %s635 = scalar_lea.hbm %s5, %s634
          %s637 = sshll.u32 %s595, 4
          %s638 = int_to_ptr.vmem [resolvable:$true] %s637
          %640 = dma.vmem_to_hbm [thread:$0]  %s638, 16, %s635, %s593
        $region44: #{tpu_custom_call.1} parent=31 // pred_fallthru
          _
      $region32: #{tpu_custom_call.1} parent=5 // pred_fallthru
        _
      %p641 = scmp.le.s32.totalorder 2, %s18
      // Predicated region
      $region45: #{tpu_custom_call.1} parent=5 // pred_check
        %p642 = pneg %p641
      $region46: #{tpu_custom_call.1} parent=5 // pred_check_branch
        %644 = sbr.rel (%p642) target = $region48
      $region47: #{tpu_custom_call.1} parent=5 // pred_region
        %s645 = ssub.s32 %s18, 2
        // Predicated region
        $region49: #{tpu_custom_call.1} parent=47 // pred_check
          %p646 = pneg %p139
        $region50: #{tpu_custom_call.1} parent=47 // pred_check_branch
          %648 = sbr.rel (%p646) target = $region52
        $region51: #{tpu_custom_call.1} parent=47 // pred_region
          %s649 = sand.u32 %s124, 1
          %s650 = scalar_lea.sflag [#allocation3], %s649
          %s651 = sand.u32 %s124, 1
          %s652 = smul.addr %s651, 16
          %s653 = scalar_lea.vmem [#allocation2], %s652
          %654 = dma.done %s650, 256
        $region52: #{tpu_custom_call.1} parent=47 // pred_fallthru
          _
        // Predicated region
        $region53: #{tpu_custom_call.1} parent=47 // pred_check
          %p655 = pneg %p167
        $region54: #{tpu_custom_call.1} parent=47 // pred_check_branch
          %657 = sbr.rel (%p655) target = $region56
        $region55: #{tpu_custom_call.1} parent=47 // pred_region
          %s658 = sand.u32 %s24, 1
          %s659 = scalar_lea.sflag [#allocation5], %s658
          %s660 = sand.u32 %s152, 1
          %s661 = scalar_lea.vmem [#allocation4], %s660
          %662 = dma.done %s659, 16
        $region56: #{tpu_custom_call.1} parent=47 // pred_fallthru
          _
        // Predicated region
        $region57: #{tpu_custom_call.1} parent=47 // pred_check
          %p663 = pneg %p195
        $region58: #{tpu_custom_call.1} parent=47 // pred_check_branch
          %665 = sbr.rel (%p663) target = $region60
        $region59: #{tpu_custom_call.1} parent=47 // pred_region
          %s666 = sand.u32 %s24, 1
          %s667 = scalar_lea.sflag [#allocation5], %s666
          %s668 = sand.u32 %s180, 1
          %s669 = scalar_lea.vmem [#allocation6], %s668
          %670 = dma.done %s667, 16
        $region60: #{tpu_custom_call.1} parent=47 // pred_fallthru
          _
      $region48: #{tpu_custom_call.1} parent=5 // pred_fallthru
        _
    $region6: #{tpu_custom_call.1} parent=1 // loop_footer
      %s22 = sadd.s32 1, %s18
    $region7: #{tpu_custom_call.1} parent=1 // loop_footer_branch
      %17 = sbr.rel target = $region3
    $region8: #{tpu_custom_call.1} parent=1 // loop_exit
      _
    %671 = vsyncpa [#allocation3], 1
    %s672 = scalar_lea.sflag [#allocation3], 1
    %673 = vsyncpa %s672, 1
    %674 = vsyncpa [#allocation5], 1
    %s675 = scalar_lea.sflag [#allocation5], 1
    %676 = vsyncpa %s675, 1

</llo_original>
